<compile_context>
chip_gen: v7x
topology: tpu7x:2x2x1
jax: 0.10.0
libtpu: 0.0.40
codegen_flags: <defaults>
</compile_context>

<pallas_src>
import jax
import jax.numpy as jnp
from jax.experimental import pallas as pl
from jax.experimental.pallas import tpu as pltpu

_VMEM = pltpu.MemorySpace.VMEM


# --------------------------------------------------------------------------------------
# helpers
# --------------------------------------------------------------------------------------
def _choose_row_tile(n):
    """Largest row tile in {512, 256, 128} that still yields >= 2 grid steps after padding."""
    for tm in (512, 256, 128):
        if n >= 2 * tm:
            return tm
    return 128


def _vmem_capacity_bytes():
    try:
        info = pltpu.get_tpu_info()
        cap = getattr(info, "vmem_capacity_bytes", None)
        if cap:
            return int(cap)
    except Exception:
        pass
    return 64 << 20  # conservative fallback (v7x per-core VMEM)


def _vmem_limit(need_bytes):
    """Scoped-VMEM limit: actual need + slack, clamped to [16 MiB, capacity - 8 MiB headroom]."""
    cap = _vmem_capacity_bytes() - (8 << 20)
    need = int(need_bytes) + (2 << 20)
    return int(min(max(need, 16 << 20), cap))


def _pad_to(x, rows=None, cols=None):
    r = 0 if rows is None else rows - x.shape[0]
    c = 0 if cols is None else cols - x.shape[1]
    if r == 0 and c == 0:
        return x
    return jnp.pad(x, ((0, r), (0, c)))


# --------------------------------------------------------------------------------------
# kernels
# --------------------------------------------------------------------------------------
def _xw_kernel(x_ref, w_ref, o_ref):
    # (TM, F) @ (F, Hp) -> (TM, Hp); tile cast to bf16 on the VPU (hidden under DMA),
    # MXU matmul with f32 accumulation, bf16 store.
    x = x_ref[...].astype(jnp.bfloat16)
    o_ref[...] = jnp.dot(x, w_ref[...], preferred_element_type=jnp.float32).astype(o_ref.dtype)


def _prop_bias_relu_kernel(a_ref, h_ref, b_ref, o_ref):
    # One GraphConv propagation row tile: (TM, Np) @ (Np, Hp); bias added AFTER the
    # A-multiply (DGL semantics), then ReLU.  A tile cast to bf16 in-kernel; f32 accumulate.
    a = a_ref[...].astype(jnp.bfloat16)
    acc = jnp.dot(a, h_ref[...], preferred_element_type=jnp.float32)
    o_ref[...] = jnp.maximum(acc + b_ref[...], 0.0).astype(o_ref.dtype)


def _layer2_gather_kernel(a_tgt_ref, h_ref, w_ref, b_ref, o_ref):
    # Fused layer-2 + gather: logits[g] = (A[tgt_g, :] @ H1) @ W2 + b2.
    a = a_tgt_ref[...].astype(jnp.bfloat16)
    t = jnp.dot(a, h_ref[...], preferred_element_type=jnp.float32)
    o_ref[...] = jnp.dot(t, w_ref[...], preferred_element_type=jnp.float32) + b_ref[...]


# --------------------------------------------------------------------------------------
# forward wrapper (mirrors GCNNodeCiteSeer.forward)
# --------------------------------------------------------------------------------------
def gcn_node_citeseer_forward(a_hat, in_feat, params, target_node, batch_num_nodes,
                              if_exp=True):
    """a_hat: (N, N) normalized weighted adjacency with convention A[dst, src] (dense
    materialization of the DGL graph + e_weight + norm='both').  Pass a_hat / in_feat in
    bf16 (and already row-padded to a multiple of 128, if possible) for peak performance;
    any float dtype works — tiles are cast to bf16 inside the kernels."""
    w1, b1, w2, b2 = params
    N, F = in_feat.shape
    h_feats = w1.shape[1]
    num_classes = w2.shape[1]
    num_graphs = target_node.shape[0]

    # ---- padding: row tile, padded node count, lane-dense hidden width ------------------
    tm = _choose_row_tile(N)
    n_pad = int(pl.cdiv(N, tm)) * tm
    hp = int(pl.cdiv(h_feats, 128)) * 128
    n_tiles = n_pad // tm

    a_p = _pad_to(a_hat, rows=n_pad, cols=n_pad)           # zero rows/cols beyond N
    x_p = _pad_to(in_feat, rows=n_pad)                      # zero rows beyond N
    w1_p = _pad_to(w1, cols=hp).astype(jnp.bfloat16)        # zero cols beyond h_feats
    b1_p = _pad_to(b1.astype(jnp.float32), cols=hp)
    w2_p = _pad_to(w2.astype(jnp.float32), rows=hp)         # zero rows beyond h_feats
    b2_f = b2.astype(jnp.float32)

    a_bytes = jnp.dtype(a_p.dtype).itemsize
    x_bytes = jnp.dtype(x_p.dtype).itemsize

    # ---- layer 1, step 1: XW1 = X @ W1 (reassociated: W before A) -----------------------
    xw1 = pl.pallas_call(
        _xw_kernel,
        out_shape=jax.ShapeDtypeStruct((n_pad, hp), jnp.bfloat16),
        grid=(n_tiles,),
        in_specs=[pl.BlockSpec((tm, F), lambda i: (i, 0)),          # X row tile (pipelined)
                  pl.BlockSpec((F, hp), lambda i: (0, 0))],         # W1 resident
        out_specs=pl.BlockSpec((tm, hp), lambda i: (i, 0)),
        compiler_params=pltpu.CompilerParams(
            dimension_semantics=("parallel",),
            vmem_limit_bytes=_vmem_limit(
                2 * (tm * F * x_bytes + F * hp * 2 + tm * hp * 2))),
    )(x_p, w1_p)

    # ---- layer 1, step 2: H1 = relu(A @ XW1 + b1); A streamed as (tm, n_pad) row tiles ---
    h1 = pl.pallas_call(
        _prop_bias_relu_kernel,
        out_shape=jax.ShapeDtypeStruct((n_pad, hp), jnp.bfloat16),
        grid=(n_tiles,),
        in_specs=[pl.BlockSpec((tm, n_pad), lambda i: (i, 0)),      # A row tile (pipelined)
                  pl.BlockSpec((n_pad, hp), lambda i: (0, 0)),      # XW1 resident in VMEM
                  pl.BlockSpec((1, hp), lambda i: (0, 0))],         # bias
        out_specs=pl.BlockSpec((tm, hp), lambda i: (i, 0)),
        compiler_params=pltpu.CompilerParams(
            dimension_semantics=("parallel",),
            vmem_limit_bytes=_vmem_limit(
                2 * (tm * n_pad * a_bytes + n_pad * hp * 2 + hp * 4 + tm * hp * 2))),
    )(a_p, xw1, b1_p)

    # ---- batched-graph target offsets (matches the torch cat([0], cumsum)) --------------
    offsets = jnp.concatenate(
        [jnp.zeros((1,), jnp.int32), jnp.cumsum(batch_num_nodes.astype(jnp.int32))])[:-1]
    tgt = target_node.astype(jnp.int32) + offsets

    # Row gather of the num_graphs target rows of A done in XLA (a few rows, negligible);
    # the layer-2 kernel then only ever touches those rows.
    a_tgt = a_p[tgt]                                                # (num_graphs, n_pad)

    # ---- layer 2 fused with the gather: logits = (A[tgt] @ H1) @ W2 + b2 -----------------
    logits = pl.pallas_call(
        _layer2_gather_kernel,
        out_shape=jax.ShapeDtypeStruct((num_graphs, num_classes), jnp.float32),
        in_specs=[pl.BlockSpec(memory_space=_VMEM)] * 4,
        out_specs=pl.BlockSpec(memory_space=_VMEM),
        compiler_params=pltpu.CompilerParams(
            vmem_limit_bytes=_vmem_limit(
                num_graphs * n_pad * a_bytes + n_pad * hp * 2
                + hp * num_classes * 4 + num_classes * 4
                + num_graphs * num_classes * 4)),
    )(a_tgt, h1, w2_p, b2_f)

    if if_exp:
        # torch F.softmax on 2D -> dim=1; row-wise softmax commutes with the row gather,
        # so it runs on num_graphs rows only.
        logits = jax.nn.softmax(logits, axis=1)
    return logits


# --------------------------------------------------------------------------------------
# pure-JAX reference (f32) for a sanity check
# --------------------------------------------------------------------------------------
def _reference_forward(a_hat, in_feat, params, target_node, batch_num_nodes, if_exp=True):
    w1, b1, w2, b2 = params
    offsets = jnp.concatenate(
        [jnp.zeros((1,), jnp.int32), jnp.cumsum(batch_num_nodes.astype(jnp.int32))])[:-1]
    tgt = target_node.astype(jnp.int32) + offsets
    h1 = jnp.maximum(a_hat @ (in_feat @ w1) + b1, 0.0)
    h = a_hat @ (h1 @ w2) + b2
    if if_exp:
        h = jax.nn.softmax(h, axis=1)
    return h[tgt]


# --------------------------------------------------------------------------------------
# deterministic example inputs (small CiteSeer-like shapes; N is NOT a multiple of 128
# on purpose, to exercise the padded / pipelined path)
# --------------------------------------------------------------------------------------
def build_example():
    key = jax.random.PRNGKey(0)
    k_a0, k_a1, k_ew, k_feat, k_w1, k_w2 = jax.random.split(key, 6)

    n0, n1 = 112, 120                                     # two graphs, unequal sizes
    N = n0 + n1                                           # 232 (not a multiple of 128)
    in_feats, h_feats, num_classes = 256, 32, 6           # CiteSeer-like (downscaled F)

    def rand_graph(k, n):
        adj = (jax.random.uniform(k, (n, n)) < 0.05).astype(jnp.float32)
        adj = jnp.maximum(adj, adj.T)
        return jnp.maximum(adj, jnp.eye(n, dtype=jnp.float32))

    a_bin = jax.scipy.linalg.block_diag(rand_graph(k_a0, n0), rand_graph(k_a1, n1))

    # Positive edge weights (the e_weight argument of the torch module).
    e_w = jax.random.uniform(k_ew, (N, N), minval=0.1, maxval=1.0)
    a_w = a_bin * e_w

    # DGL GraphConv norm='both'-style symmetric normalization (harness-level approximation).
    out_deg = jnp.clip(jnp.sum(a_bin, axis=0), 1.0, None)
    in_deg = jnp.clip(jnp.sum(a_bin, axis=1), 1.0, None)
    a_hat = ((in_deg ** -0.5)[:, None] * a_w * (out_deg ** -0.5)[None, :]).astype(jnp.float32)

    in_feat = jax.random.normal(k_feat, (N, in_feats), dtype=jnp.float32)

    def glorot(k, shape):
        fan_in, fan_out = shape
        lim = (6.0 / (fan_in + fan_out)) ** 0.5
        return jax.random.uniform(k, shape, minval=-lim, maxval=lim, dtype=jnp.float32)

    w1 = glorot(k_w1, (in_feats, h_feats))
    w2 = glorot(k_w2, (h_feats, num_classes))
    b1 = jnp.full((1, h_feats), 0.01, dtype=jnp.float32)
    b2 = jnp.full((1, num_classes), 0.01, dtype=jnp.float32)

    target_node = jnp.array([3, 77], dtype=jnp.int32)     # local index per graph
    batch_num_nodes = jnp.array([n0, n1], dtype=jnp.int32)

    return a_hat, in_feat, (w1, b1, w2, b2), target_node, batch_num_nodes


if __name__ == "__main__":
    a_hat, in_feat, params, target_node, batch_num_nodes = build_example()

    # Cast the big arrays to bf16 once at the API boundary (halves the HBM stream the
    # kernels read; the kernels also accept f32 and cast per tile).
    a_bf = a_hat.astype(jnp.bfloat16)
    x_bf = in_feat.astype(jnp.bfloat16)

    out = gcn_node_citeseer_forward(
        a_bf, x_bf, params, target_node, batch_num_nodes, if_exp=True)
    out = jax.block_until_ready(out)

    ref = _reference_forward(
        a_hat, in_feat, params, target_node, batch_num_nodes, if_exp=True)

    assert out.shape == (2, 6), out.shape
    assert bool(jnp.all(jnp.isfinite(out)))
    # bf16 MXU inputs with f32 accumulation -> loose tolerance on softmax probabilities.
    assert bool(jnp.max(jnp.abs(out - ref)) < 0.05), float(jnp.max(jnp.abs(out - ref)))
    print("KERNEL_OK")
</pallas_src>

<mosaic_0001>
module attributes {stable_mosaic.version = 11 : i64} {
  func.func @_xw_kernel(%arg0: i32, %arg1: memref<128x256xbf16, #tpu.memory_space<vmem>>, %arg2: memref<256x128xbf16, #tpu.memory_space<vmem>>, %arg3: memref<128x128xbf16, #tpu.memory_space<vmem>>) attributes {dimension_semantics = [#tpu.dimension_semantics<parallel>], iteration_bounds = array<i64: 2>, scalar_prefetch = 0 : i64, scratch_operands = 0 : i64, tpu.core_type = #tpu.core_type<tc>, window_params = [{transform_indices = @transform_0, window_bounds = array<i64: 128, 256>}, {pipeline_mode = #tpu.pipeline_mode<synchronous>, transform_indices = @transform_1, window_bounds = array<i64: 256, 128>}, {transform_indices = @transform_2, window_bounds = array<i64: 128, 128>}]} {
    %c0 = arith.constant 0 : index
    %c0_0 = arith.constant 0 : index
    %0 = vector.load %arg1[%c0, %c0_0] : memref<128x256xbf16, #tpu.memory_space<vmem>>, vector<128x256xbf16>
    %c0_1 = arith.constant 0 : index
    %c0_2 = arith.constant 0 : index
    %1 = vector.load %arg2[%c0_1, %c0_2] : memref<256x128xbf16, #tpu.memory_space<vmem>>, vector<256x128xbf16>
    %cst = arith.constant dense<0.000000e+00> : vector<128x128xf32>
    %2 = tpu.matmul %0, %1, %cst {dimension_numbers = #tpu.dot_dimension_numbers<[1], [0], [0], [1], [0, 0, 1, 1], [], []>} : vector<128x256xbf16>, vector<256x128xbf16>, vector<128x128xf32> -> vector<128x128xf32>
    %3 = arith.truncf %2 : vector<128x128xf32> to vector<128x128xbf16>
    %c0_3 = arith.constant 0 : index
    %c0_4 = arith.constant 0 : index
    %4 = vector.load %arg3[%c0_3, %c0_4] : memref<128x128xbf16, #tpu.memory_space<vmem>>, vector<128x128xbf16>
    tpu.vector_store %arg3[%c0_3, %c0_4], %3 {strides = array<i32>} : memref<128x128xbf16, #tpu.memory_space<vmem>>, vector<128x128xbf16>,
    return
  }
  func.func @transform_0(%arg0: i32) -> (i32, i32) {
    %c0_i32 = arith.constant 0 : i32
    %c0_i32_0 = arith.constant 0 : i32
    return %arg0, %c0_i32 : i32, i32
  }
  func.func @transform_1(%arg0: i32) -> (i32, i32) {
    %c0_i32 = arith.constant 0 : i32
    %c0_i32_0 = arith.constant 0 : i32
    %c0_i32_1 = arith.constant 0 : i32
    return %c0_i32, %c0_i32_0 : i32, i32
  }
  func.func @transform_2(%arg0: i32) -> (i32, i32) {
    %c0_i32 = arith.constant 0 : i32
    %c0_i32_0 = arith.constant 0 : i32
    return %arg0, %c0_i32 : i32, i32
  }
}

</mosaic_0001>

<llo_original>
// kernel: tpu_custom_call.1
$region0: #{tpu_custom_call.1}
  #allocation0 [shape = 'u32[]', space=smem, size = 0x4, offset = 0x4, fixed_abs, tag = 'smem constant byte address 0x4 - core index']
  #allocation1 [shape = 'u32[144,128]{1,0:T(1,128)}', space=vmem, size = 0x12000, scoped, tag = 'internal scratch']
  %s0 = inlined_call_operand.hbm [shape: bf16[256,256], index: 0, kind: input, shape index: {}]
  %s1 = inlined_call_operand.hbm [shape: bf16[256,128], index: 1, kind: input, shape index: {}]
  %s2 = inlined_call_operand.hbm [shape: bf16[256,128], index: 2, kind: output, shape index: {}]
  %s3 = sld [smem:[#allocation0]]
  $region49: #{tpu_custom_call.1} parent=0
    _
  %s5 = ssub.s32 1, %s3
  %s6 = scalar_select 0, %s5, %s3
  $region1: #{tpu_custom_call.1} parent=0
    #allocation2 [shape = 'u8[131072]{0}', space=vmem, size = 0x20000, scoped, tag = 'input window, operand 0']
    #allocation3 [shape = 's32[2]{0}', space=sflag, size = 0x8, scoped, tag = 'scoped memory for tpu_custom_call.1']
    #allocation4 [shape = 's32[2]{0}', space=sflag, size = 0x8, scoped, tag = 'scoped memory for tpu_custom_call.1']
    #allocation5 [shape = 'u8[65536]{0}', space=vmem, size = 0x10000, scoped, tag = 'input window, operand 1, single buffered']
    #allocation6 [shape = 's32[1]{0}', space=sflag, size = 0x4, scoped, tag = 'scoped memory for tpu_custom_call.1']
    #allocation7 [shape = 'u8[65536]{0}', space=vmem, size = 0x10000, scoped, tag = 'output window, operand 0']
    %7 = vsyncpa [#allocation3], 0
    %s8 = scalar_lea.sflag [#allocation3], 1
    %9 = vsyncpa %s8, 0
    %10 = vsyncpa [#allocation6], 0
    %11 = vsyncpa [#allocation4], 0
    %s12 = scalar_lea.sflag [#allocation4], 1
    %13 = vsyncpa %s12, 0
    loop: start=0, step=1, limit=4
    $region2: #{tpu_custom_call.1} parent=1 // loop_pre_header
      _
    $region3: #{tpu_custom_call.1} parent=1 // loop_header
      %s15 = sphi 0, %s19
      %p16 = scmp.ge.s32.totalorder %s15, 4
      %s25 = sphi 0, %s27
      %s28 = sphi 0, %s25
      %s29 = sphi 0, %s28
      %s45 = sphi 0, %s29
      %s49 = sphi 0, %s49
      %s51 = sphi 0, %s49
      %s52 = sphi 0, %s51
      %s66 = sphi 0, %s52
      %s72 = sphi 0, %s74
      %s75 = sphi 0, %s72
      %s76 = sphi 0, %s75
      %s92 = sphi 0, %s76
    $region4: #{tpu_custom_call.1} parent=1 // loop_header_branch
      %18 = sbr.rel (%p16) target = $region8
    $region5: #{tpu_custom_call.1} parent=1 // loop_body
      %s20 = ssub.s32 %s15, 1
      %s21 = ssub.s32 %s15, 2
      %s22 = sadd.s32 %s15, 1
      %s23 = ssub.s32 %s15, %s22
      %p24 = scmp.eq.s32.totalorder %s23, 0
      %s26 = sadd.s32 %s25, 1
      %s27 = scalar_select %p24, %s25, %s26
      %p30 = pneg %p24
      %p31 = scmp.eq.s32.totalorder %s15, 1
      %p32 = por %p30, %p31
      %p33 = scmp.ne.s32.totalorder %s25, %s28
      %p34 = scmp.eq.s32.totalorder %s15, 0
      %p35 = por %p33, %p34
      %p36 = scmp.ne.s32.totalorder %s25, %s28
      %p37 = scmp.eq.s32.totalorder %s20, 1
      %p38 = por %p36, %p37
      %p39 = scmp.ne.s32.totalorder %s28, %s29
      %p40 = scmp.eq.s32.totalorder %s20, 0
      %p41 = por %p39, %p40
      %p42 = scmp.ne.s32.totalorder %s28, %s29
      %p43 = scmp.eq.s32.totalorder %s21, 1
      %p44 = por %p42, %p43
      %p46 = scmp.ne.s32.totalorder %s29, %s45
      %p47 = scmp.eq.s32.totalorder %s21, 0
      %p48 = por %p46, %p47
      %s50 = sadd.s32 %s49, 1
      %p53 = scmp.eq.s32.totalorder %s15, 1
      %p54 = scmp.ne.s32.totalorder %s49, %s51
      %p55 = scmp.eq.s32.totalorder %s15, 0
      %p56 = por %p54, %p55
      %p57 = scmp.ne.s32.totalorder %s49, %s51
      %p58 = scmp.eq.s32.totalorder %s20, 1
      %p59 = por %p57, %p58
      %p60 = scmp.ne.s32.totalorder %s51, %s52
      %p61 = scmp.eq.s32.totalorder %s20, 0
      %p62 = por %p60, %p61
      %p63 = scmp.ne.s32.totalorder %s51, %s52
      %p64 = scmp.eq.s32.totalorder %s21, 1
      %p65 = por %p63, %p64
      %p67 = scmp.ne.s32.totalorder %s52, %s66
      %p68 = scmp.eq.s32.totalorder %s21, 0
      %p69 = por %p67, %p68
      %s70 = ssub.s32 %s15, %s22
      %p71 = scmp.eq.s32.totalorder %s70, 0
      %s73 = sadd.s32 %s72, 1
      %s74 = scalar_select %p71, %s72, %s73
      %p77 = pneg %p71
      %p78 = scmp.eq.s32.totalorder %s15, 1
      %p79 = por %p77, %p78
      %p80 = scmp.ne.s32.totalorder %s72, %s75
      %p81 = scmp.eq.s32.totalorder %s15, 0
      %p82 = por %p80, %p81
      %p83 = scmp.ne.s32.totalorder %s72, %s75
      %p84 = scmp.eq.s32.totalorder %s20, 1
      %p85 = por %p83, %p84
      %p86 = scmp.ne.s32.totalorder %s75, %s76
      %p87 = scmp.eq.s32.totalorder %s20, 0
      %p88 = por %p86, %p87
      %p89 = scmp.ne.s32.totalorder %s75, %s76
      %p90 = scmp.eq.s32.totalorder %s21, 1
      %p91 = por %p89, %p90
      %p93 = scmp.ne.s32.totalorder %s76, %s92
      %p94 = scmp.eq.s32.totalorder %s21, 0
      %p95 = por %p93, %p94
      %p96 = scmp.le.s32.totalorder 1, %s15
      %p97 = scmp.lt.s32.totalorder %s15, 3
      %p98 = pnand %p96, %p97
      %p99 = pneg %p98
      // Predicated region
      $region9: #{tpu_custom_call.1} parent=5 // pred_check
        _
      $region10: #{tpu_custom_call.1} parent=5 // pred_check_branch
        %101 = sbr.rel (%p98) target = $region12
      $region11: #{tpu_custom_call.1} parent=5 // pred_region
        %s102 = ssub.s32 %s15, 1
        // Predicated region
        $region13: #{tpu_custom_call.1} parent=11 // pred_check
          %p103 = pneg %p62
        $region14: #{tpu_custom_call.1} parent=11 // pred_check_branch
          %105 = sbr.rel (%p103) target = $region16
        $region15: #{tpu_custom_call.1} parent=11 // pred_region
          %s107 = ssub.s32 2048, 2048
          %108 = vsyncadd [#allocation6], %s107
          %s109 = sshll.u32 [#allocation5], 4
          %s110 = int_to_ptr.vmem [resolvable:$true] %s109
          %115 = dma.hbm_to_vmem [thread:$0]  %s1, 2048, %s110, [#allocation6], 64, 64, 4
        $region16: #{tpu_custom_call.1} parent=11 // pred_fallthru
          _
      $region12: #{tpu_custom_call.1} parent=5 // pred_fallthru
        _
      %p116 = scmp.lt.s32.totalorder %s15, 2
      // Predicated region
      $region17: #{tpu_custom_call.1} parent=5 // pred_check
        %p117 = pneg %p116
      $region18: #{tpu_custom_call.1} parent=5 // pred_check_branch
        %119 = sbr.rel (%p117) target = $region20
      $region19: #{tpu_custom_call.1} parent=5 // pred_region
        // Predicated region
        $region21: #{tpu_custom_call.1} parent=19 // pred_check
          %p120 = pneg %p35
        $region22: #{tpu_custom_call.1} parent=19 // pred_check_branch
          %122 = sbr.rel (%p120) target = $region24
        $region23: #{tpu_custom_call.1} parent=19 // pred_region
          %s123 = sand.u32 %s25, 1
          %s124 = scalar_lea.sflag [#allocation3], %s123
          %s125 = sand.u32 %s25, 1
          %s126 = smul.addr %s125, 128
          %s127 = scalar_lea.vmem [#allocation2], %s126
          %s128 = smul.u32 16, %s15
          %s130 = ssub.s32 2048, 2048
          %131 = vsyncadd %s124, %s130
          %s132 = smul.addr %s128, 2
          %s133 = smul.addr %s132, 64
          %s134 = scalar_lea.hbm %s0, %s133
          %s135 = sshll.u32 %s127, 4
          %s136 = int_to_ptr.vmem [resolvable:$true] %s135
          %141 = dma.hbm_to_vmem [thread:$0]  %s134, 2048, %s136, %s124, 128, 128, 8
        $region24: #{tpu_custom_call.1} parent=19 // pred_fallthru
          _
      $region20: #{tpu_custom_call.1} parent=5 // pred_fallthru
        _
      %p142 = scmp.le.s32.totalorder 1, %s15
      %p143 = scmp.lt.s32.totalorder %s15, 3
      %p144 = pnand %p142, %p143
      %p145 = pneg %p144
      // Predicated region
      $region25: #{tpu_custom_call.1} parent=5 // pred_check
        _
      $region26: #{tpu_custom_call.1} parent=5 // pred_check_branch
        %147 = sbr.rel (%p144) target = $region28
      $region27: #{tpu_custom_call.1} parent=5 // pred_region
        %s148 = ssub.s32 %s15, 1
        %s149 = sand.u32 %s28, 1
        %s150 = scalar_lea.sflag [#allocation3], %s149
        %s151 = sand.u32 %s28, 1
        %s152 = smul.addr %s151, 128
        %s153 = scalar_lea.vmem [#allocation2], %s152
        // Predicated region
        $region29: #{tpu_custom_call.1} parent=27 // pred_check
          %p154 = pneg %p41
        $region30: #{tpu_custom_call.1} parent=27 // pred_check_branch
          %156 = sbr.rel (%p154) target = $region32
        $region31: #{tpu_custom_call.1} parent=27 // pred_region
          %157 = dma.done %s150, 2048
        $region32: #{tpu_custom_call.1} parent=27 // pred_fallthru
          _
        // Predicated region
        $region33: #{tpu_custom_call.1} parent=27 // pred_check
          %p158 = pneg %p62
        $region34: #{tpu_custom_call.1} parent=27 // pred_check_branch
          %160 = sbr.rel (%p158) target = $region36
        $region35: #{tpu_custom_call.1} parent=27 // pred_region
          %161 = dma.done [#allocation6], 2048
        $region36: #{tpu_custom_call.1} parent=27 // pred_fallthru
          _
        %s162 = sand.u32 %s28, 1
        %s163 = scalar_lea.sflag [#allocation3], %s162
        %s164 = sand.u32 %s28, 1
        %s165 = smul.addr %s164, 128
        %s166 = scalar_lea.vmem [#allocation2], %s165
        %p167 = pneg %p41
        %p168 = pneg %p38
        %p169 = pneg %p62
        %p170 = pneg %p59
        %p171 = pneg %p88
        %p172 = pneg %p85
        %s173 = sand.u32 %s75, 1
        %s174 = scalar_lea.sflag [#allocation4], %s173
        %s175 = sand.u32 %s75, 1
        %s176 = smul.addr %s175, 64
        %s177 = scalar_lea.vmem [#allocation7], %s176
        %s178 = smul.u32 16, %s20
        %s179 = smul.u32 16, %s20
        %v181 = vld [vmem:[%s153] sm:$0xff]
        %v182 = vld [vmem:[%s153 + $0x8] sm:$0xff]
        %v183 = vld [vmem:[%s153 + $0x10] sm:$0xff]
        %v184 = vld [vmem:[%s153 + $0x18] sm:$0xff]
        %v185 = vld [vmem:[%s153 + $0x20] sm:$0xff]
        %v186 = vld [vmem:[%s153 + $0x28] sm:$0xff]
        %v187 = vld [vmem:[%s153 + $0x30] sm:$0xff]
        %v188 = vld [vmem:[%s153 + $0x38] sm:$0xff]
        %v189 = vld [vmem:[%s153 + $0x40] sm:$0xff]
        %v190 = vld [vmem:[%s153 + $0x48] sm:$0xff]
        %v191 = vld [vmem:[%s153 + $0x50] sm:$0xff]
        %v192 = vld [vmem:[%s153 + $0x58] sm:$0xff]
        %v193 = vld [vmem:[%s153 + $0x60] sm:$0xff]
        %v194 = vld [vmem:[%s153 + $0x68] sm:$0xff]
        %v195 = vld [vmem:[%s153 + $0x70] sm:$0xff]
        %v196 = vld [vmem:[%s153 + $0x78] sm:$0xff]
        %v197 = vld [vmem:[#allocation5] sm:$0xf]
        %v198 = vld [vmem:[#allocation5 + $0x4] sm:$0xf]
        %v199 = vld [vmem:[#allocation5 + $0x8] sm:$0xf]
        %v200 = vld [vmem:[#allocation5 + $0xc] sm:$0xf]
        %v201 = vld [vmem:[#allocation5 + $0x10] sm:$0xf]
        %v202 = vld [vmem:[#allocation5 + $0x14] sm:$0xf]
        %v203 = vld [vmem:[#allocation5 + $0x18] sm:$0xf]
        %v204 = vld [vmem:[#allocation5 + $0x1c] sm:$0xf]
        %v205 = vld [vmem:[#allocation5 + $0x20] sm:$0xf]
        %v206 = vld [vmem:[#allocation5 + $0x24] sm:$0xf]
        %v207 = vld [vmem:[#allocation5 + $0x28] sm:$0xf]
        %v208 = vld [vmem:[#allocation5 + $0x2c] sm:$0xf]
        %v209 = vld [vmem:[#allocation5 + $0x30] sm:$0xf]
        %v210 = vld [vmem:[#allocation5 + $0x34] sm:$0xf]
        %v211 = vld [vmem:[#allocation5 + $0x38] sm:$0xf]
        %v212 = vld [vmem:[#allocation5 + $0x3c] sm:$0xf]
        %v213 = vld [vmem:[#allocation5 + $0x40] sm:$0xf]
        %v214 = vld [vmem:[#allocation5 + $0x44] sm:$0xf]
        %v215 = vld [vmem:[#allocation5 + $0x48] sm:$0xf]
        %v216 = vld [vmem:[#allocation5 + $0x4c] sm:$0xf]
        %v217 = vld [vmem:[#allocation5 + $0x50] sm:$0xf]
        %v218 = vld [vmem:[#allocation5 + $0x54] sm:$0xf]
        %v219 = vld [vmem:[#allocation5 + $0x58] sm:$0xf]
        %v220 = vld [vmem:[#allocation5 + $0x5c] sm:$0xf]
        %v221 = vld [vmem:[#allocation5 + $0x60] sm:$0xf]
        %v222 = vld [vmem:[#allocation5 + $0x64] sm:$0xf]
        %v223 = vld [vmem:[#allocation5 + $0x68] sm:$0xf]
        %v224 = vld [vmem:[#allocation5 + $0x6c] sm:$0xf]
        %v225 = vld [vmem:[#allocation5 + $0x70] sm:$0xf]
        %v226 = vld [vmem:[#allocation5 + $0x74] sm:$0xf]
        %v227 = vld [vmem:[#allocation5 + $0x78] sm:$0xf]
        %v228 = vld [vmem:[#allocation5 + $0x7c] sm:$0xf]
        %v245 = vunpack.c.l.b16 %v181
        %v246 = vunpack.c.h.b16 %v181
        %v247 = vunpack.c.l.b16 %v182
        %v248 = vunpack.c.h.b16 %v182
        %v249 = vunpack.c.l.b16 %v183
        %v250 = vunpack.c.h.b16 %v183
        %v251 = vunpack.c.l.b16 %v184
        %v252 = vunpack.c.h.b16 %v184
        %v253 = vunpack.c.l.b16 %v185
        %v254 = vunpack.c.h.b16 %v185
        %v255 = vunpack.c.l.b16 %v186
        %v256 = vunpack.c.h.b16 %v186
        %v257 = vunpack.c.l.b16 %v187
        %v258 = vunpack.c.h.b16 %v187
        %v259 = vunpack.c.l.b16 %v188
        %v260 = vunpack.c.h.b16 %v188
        %v261 = vunpack.c.l.b16 %v189
        %v262 = vunpack.c.h.b16 %v189
        %v263 = vunpack.c.l.b16 %v190
        %v264 = vunpack.c.h.b16 %v190
        %v265 = vunpack.c.l.b16 %v191
        %v266 = vunpack.c.h.b16 %v191
        %v267 = vunpack.c.l.b16 %v192
        %v268 = vunpack.c.h.b16 %v192
        %v269 = vunpack.c.l.b16 %v193
        %v270 = vunpack.c.h.b16 %v193
        %v271 = vunpack.c.l.b16 %v194
        %v272 = vunpack.c.h.b16 %v194
        %v273 = vunpack.c.l.b16 %v195
        %v274 = vunpack.c.h.b16 %v195
        %v275 = vunpack.c.l.b16 %v196
        %v276 = vunpack.c.h.b16 %v196
        %v277 = vpack.c.b16 %v247, %v245
        %v278 = vpack.c.b16 %v248, %v246
        %v279 = vpack.c.b16 %v251, %v249
        %v280 = vpack.c.b16 %v252, %v250
        %v281 = vpack.c.b16 %v255, %v253
        %v282 = vpack.c.b16 %v256, %v254
        %v283 = vpack.c.b16 %v259, %v257
        %v284 = vpack.c.b16 %v260, %v258
        %v285 = vpack.c.b16 %v263, %v261
        %v286 = vpack.c.b16 %v264, %v262
        %v287 = vpack.c.b16 %v267, %v265
        %v288 = vpack.c.b16 %v268, %v266
        %v289 = vpack.c.b16 %v271, %v269
        %v290 = vpack.c.b16 %v272, %v270
        %v291 = vpack.c.b16 %v275, %v273
        %v292 = vpack.c.b16 %v276, %v274
        %v341 = vunpack.c.l.b16 %v197
        %v342 = vunpack.c.l.b16 %v198
        %v343 = vunpack.c.l.b16 %v199
        %v344 = vunpack.c.l.b16 %v200
        %v345 = vunpack.c.l.b16 %v201
        %v346 = vunpack.c.l.b16 %v202
        %v347 = vunpack.c.l.b16 %v203
        %v348 = vunpack.c.l.b16 %v204
        %v349 = vunpack.c.l.b16 %v205
        %v350 = vunpack.c.l.b16 %v206
        %v351 = vunpack.c.l.b16 %v207
        %v352 = vunpack.c.l.b16 %v208
        %v353 = vunpack.c.l.b16 %v209
        %v354 = vunpack.c.l.b16 %v210
        %v355 = vunpack.c.l.b16 %v211
        %v356 = vunpack.c.l.b16 %v212
        %v357 = vunpack.c.l.b16 %v213
        %v358 = vunpack.c.l.b16 %v214
        %v359 = vunpack.c.l.b16 %v215
        %v360 = vunpack.c.l.b16 %v216
        %v361 = vunpack.c.l.b16 %v217
        %v362 = vunpack.c.l.b16 %v218
        %v363 = vunpack.c.l.b16 %v219
        %v364 = vunpack.c.l.b16 %v220
        %v365 = vunpack.c.l.b16 %v221
        %v366 = vunpack.c.l.b16 %v222
        %v367 = vunpack.c.l.b16 %v223
        %v368 = vunpack.c.l.b16 %v224
        %v369 = vunpack.c.l.b16 %v225
        %v370 = vunpack.c.l.b16 %v226
        %v371 = vunpack.c.l.b16 %v227
        %v372 = vunpack.c.l.b16 %v228
        %v373 = vpack.c.b16 %v342, %v341
        %v374 = vpack.c.b16 %v344, %v343
        %v375 = vpack.c.b16 %v346, %v345
        %v376 = vpack.c.b16 %v348, %v347
        %v377 = vpack.c.b16 %v350, %v349
        %v378 = vpack.c.b16 %v352, %v351
        %v379 = vpack.c.b16 %v354, %v353
        %v380 = vpack.c.b16 %v356, %v355
        %v381 = vpack.c.b16 %v358, %v357
        %v382 = vpack.c.b16 %v360, %v359
        %v383 = vpack.c.b16 %v362, %v361
        %v384 = vpack.c.b16 %v364, %v363
        %v385 = vpack.c.b16 %v366, %v365
        %v386 = vpack.c.b16 %v368, %v367
        %v387 = vpack.c.b16 %v370, %v369
        %v388 = vpack.c.b16 %v372, %v371
        %405 = vmatprep.subr.bf16.mxu0 0
        %406 = vmatpush1.bf16.msra.mxu0 %v373
        %407 = vmatprep.subr.bf16.mxu0 0
        %408 = vmatpush1.bf16.msra.mxu0 %v374
        %409 = vmatprep.subr.bf16.mxu0 0
        %410 = vmatpush1.bf16.msra.mxu0 %v375
        %411 = vmatprep.subr.bf16.mxu0 0
        %412 = vmatpush1.bf16.msra.mxu0 %v376
        %413 = vmatprep.subr.bf16.mxu0 0
        %414 = vmatpush1.bf16.msra.mxu0 %v377
        %415 = vmatprep.subr.bf16.mxu0 0
        %416 = vmatpush1.bf16.msra.mxu0 %v378
        %417 = vmatprep.subr.bf16.mxu0 0
        %418 = vmatpush1.bf16.msra.mxu0 %v379
        %419 = vmatprep.subr.bf16.mxu0 0
        %420 = vmatpush1.bf16.msra.mxu0 %v380
        %421 = vmatprep.subr.bf16.mxu0 0
        %422 = vmatpush1.bf16.msra.mxu0 %v381
        %423 = vmatprep.subr.bf16.mxu0 0
        %424 = vmatpush1.bf16.msra.mxu0 %v382
        %425 = vmatprep.subr.bf16.mxu0 0
        %426 = vmatpush1.bf16.msra.mxu0 %v383
        %427 = vmatprep.subr.bf16.mxu0 0
        %428 = vmatpush1.bf16.msra.mxu0 %v384
        %429 = vmatprep.subr.bf16.mxu0 0
        %430 = vmatpush1.bf16.msra.mxu0 %v385
        %431 = vmatprep.subr.bf16.mxu0 0
        %432 = vmatpush1.bf16.msra.mxu0 %v386
        %433 = vmatprep.subr.bf16.mxu0 0
        %434 = vmatpush1.bf16.msra.mxu0 %v387
        %435 = vmatprep.subr.bf16.mxu0 0
        %436 = vmatpush1.bf16.msra.mxu0 %v388
        %437 = vmatprep.mubr.bf16.mxu0 %v278
        %438 = vmatmul.mubr.bf16.gmra.mrb[0].mxu0 %v277
        %v439 = vpop.f32.mrb[0].mxu0
        %v440 = vadd.f32 0.0, %v439
        %v441 = vpop.f32.mrb[0].mxu0
        %v442 = vpop.f32.mrb[0].mxu0
        %v443 = vadd.f32 0.0, %v442
        %v444 = vpop.f32.mrb[0].mxu0
        %445 = vmatprep.mubr.bf16.mxu0 %v280
        %446 = vmatmul.mubr.bf16.gmra.mrb[0].mxu0 %v279
        %v447 = vpop.f32.mrb[0].mxu0
        %v448 = vadd.f32 0.0, %v447
        %v449 = vpop.f32.mrb[0].mxu0
        %v450 = vpop.f32.mrb[0].mxu0
        %v451 = vadd.f32 0.0, %v450
        %v452 = vpop.f32.mrb[0].mxu0
        %453 = vmatprep.mubr.bf16.mxu0 %v282
        %454 = vmatmul.mubr.bf16.gmra.mrb[0].mxu0 %v281
        %v455 = vpop.f32.mrb[0].mxu0
        %v456 = vadd.f32 0.0, %v455
        %v457 = vpop.f32.mrb[0].mxu0
        %v458 = vpop.f32.mrb[0].mxu0
        %v459 = vadd.f32 0.0, %v458
        %v460 = vpop.f32.mrb[0].mxu0
        %461 = vmatprep.mubr.bf16.mxu0 %v284
        %462 = vmatmul.mubr.bf16.gmra.mrb[0].mxu0 %v283
        %v463 = vpop.f32.mrb[0].mxu0
        %v464 = vadd.f32 0.0, %v463
        %v465 = vpop.f32.mrb[0].mxu0
        %v466 = vpop.f32.mrb[0].mxu0
        %v467 = vadd.f32 0.0, %v466
        %v468 = vpop.f32.mrb[0].mxu0
        %469 = vmatprep.mubr.bf16.mxu0 %v286
        %470 = vmatmul.mubr.bf16.gmra.mrb[0].mxu0 %v285
        %v471 = vpop.f32.mrb[0].mxu0
        %v472 = vadd.f32 0.0, %v471
        %v473 = vpop.f32.mrb[0].mxu0
        %v474 = vpop.f32.mrb[0].mxu0
        %v475 = vadd.f32 0.0, %v474
        %v476 = vpop.f32.mrb[0].mxu0
        %477 = vmatprep.mubr.bf16.mxu0 %v288
        %478 = vmatmul.mubr.bf16.gmra.mrb[0].mxu0 %v287
        %v479 = vpop.f32.mrb[0].mxu0
        %v480 = vadd.f32 0.0, %v479
        %v481 = vpop.f32.mrb[0].mxu0
        %v482 = vpop.f32.mrb[0].mxu0
        %v483 = vadd.f32 0.0, %v482
        %v484 = vpop.f32.mrb[0].mxu0
        %485 = vmatprep.mubr.bf16.mxu0 %v290
        %486 = vmatmul.mubr.bf16.gmra.mrb[0].mxu0 %v289
        %v487 = vpop.f32.mrb[0].mxu0
        %v488 = vadd.f32 0.0, %v487
        %v489 = vpop.f32.mrb[0].mxu0
        %v490 = vpop.f32.mrb[0].mxu0
        %v491 = vadd.f32 0.0, %v490
        %v492 = vpop.f32.mrb[0].mxu0
        %493 = vmatprep.mubr.bf16.mxu0 %v292
        %494 = vmatmul.mubr.bf16.gmra.mrb[0].mxu0 %v291
        %v495 = vpop.f32.mrb[0].mxu0
        %v496 = vadd.f32 0.0, %v495
        %v497 = vpop.f32.mrb[0].mxu0
        %v498 = vpop.f32.mrb[0].mxu0
        %v499 = vadd.f32 0.0, %v498
        %v500 = vpop.f32.mrb[0].mxu0
        %501 = vdwg.mxu0
        %v502 = vpack.c.bf16 %v443, %v440
        %v503 = vpack.c.bf16 %v451, %v448
        %v504 = vpack.c.bf16 %v459, %v456
        %v505 = vpack.c.bf16 %v467, %v464
        %v506 = vpack.c.bf16 %v475, %v472
        %v507 = vpack.c.bf16 %v483, %v480
        %v508 = vpack.c.bf16 %v491, %v488
        %v509 = vpack.c.bf16 %v499, %v496
        %v518 = vunpack.c.l.b16 %v502
        %v519 = vunpack.c.h.b16 %v502
        %v520 = vunpack.c.l.b16 %v503
        %v521 = vunpack.c.h.b16 %v503
        %v522 = vunpack.c.l.b16 %v504
        %v523 = vunpack.c.h.b16 %v504
        %v524 = vunpack.c.l.b16 %v505
        %v525 = vunpack.c.h.b16 %v505
        %v526 = vunpack.c.l.b16 %v506
        %v527 = vunpack.c.h.b16 %v506
        %v528 = vunpack.c.l.b16 %v507
        %v529 = vunpack.c.h.b16 %v507
        %v530 = vunpack.c.l.b16 %v508
        %v531 = vunpack.c.h.b16 %v508
        %v532 = vunpack.c.l.b16 %v509
        %v533 = vunpack.c.h.b16 %v509
        %v534 = vpack.c.b16 %v518, %v518
        %v535 = vpack.c.b16 %v519, %v519
        %v536 = vpack.c.b16 %v520, %v520
        %v537 = vpack.c.b16 %v521, %v521
        %v538 = vpack.c.b16 %v522, %v522
        %v539 = vpack.c.b16 %v523, %v523
        %v540 = vpack.c.b16 %v524, %v524
        %v541 = vpack.c.b16 %v525, %v525
        %v542 = vpack.c.b16 %v526, %v526
        %v543 = vpack.c.b16 %v527, %v527
        %v544 = vpack.c.b16 %v528, %v528
        %v545 = vpack.c.b16 %v529, %v529
        %v546 = vpack.c.b16 %v530, %v530
        %v547 = vpack.c.b16 %v531, %v531
        %v548 = vpack.c.b16 %v532, %v532
        %v549 = vpack.c.b16 %v533, %v533
        %566 = vst [vmem:[%s177] sm:$0xf] %v534
        %567 = vst [vmem:[%s177 + $0x4] sm:$0xf] %v535
        %568 = vst [vmem:[%s177 + $0x8] sm:$0xf] %v536
        %569 = vst [vmem:[%s177 + $0xc] sm:$0xf] %v537
        %570 = vst [vmem:[%s177 + $0x10] sm:$0xf] %v538
        %571 = vst [vmem:[%s177 + $0x14] sm:$0xf] %v539
        %572 = vst [vmem:[%s177 + $0x18] sm:$0xf] %v540
        %573 = vst [vmem:[%s177 + $0x1c] sm:$0xf] %v541
        %574 = vst [vmem:[%s177 + $0x20] sm:$0xf] %v542
        %575 = vst [vmem:[%s177 + $0x24] sm:$0xf] %v543
        %576 = vst [vmem:[%s177 + $0x28] sm:$0xf] %v544
        %577 = vst [vmem:[%s177 + $0x2c] sm:$0xf] %v545
        %578 = vst [vmem:[%s177 + $0x30] sm:$0xf] %v546
        %579 = vst [vmem:[%s177 + $0x34] sm:$0xf] %v547
        %580 = vst [vmem:[%s177 + $0x38] sm:$0xf] %v548
        %581 = vst [vmem:[%s177 + $0x3c] sm:$0xf] %v549
        %s582 = sand.u32 %s75, 1
        %s583 = scalar_lea.sflag [#allocation4], %s582
        %s584 = sand.u32 %s75, 1
        %s585 = smul.addr %s584, 64
        %s586 = scalar_lea.vmem [#allocation7], %s585
        // Predicated region
        $region37: #{tpu_custom_call.1} parent=27 // pred_check
          %p587 = pneg %p85
        $region38: #{tpu_custom_call.1} parent=27 // pred_check_branch
          %589 = sbr.rel (%p587) target = $region40
        $region39: #{tpu_custom_call.1} parent=27 // pred_region
          %s590 = smul.u32 16, %s20
          %s592 = ssub.s32 1024, 1024
          %593 = vsyncadd %s583, %s592
          %s594 = smul.addr %s590, 64
          %s595 = scalar_lea.hbm %s2, %s594
          %s596 = sshll.u32 %s586, 4
          %s597 = int_to_ptr.vmem [resolvable:$true] %s596
          %602 = dma.vmem_to_hbm [thread:$0]  %s597, 1024, %s595, %s583, 64, 64, 4
        $region40: #{tpu_custom_call.1} parent=27 // pred_fallthru
          _
      $region28: #{tpu_custom_call.1} parent=5 // pred_fallthru
        _
      %p603 = scmp.le.s32.totalorder 2, %s15
      // Predicated region
      $region41: #{tpu_custom_call.1} parent=5 // pred_check
        %p604 = pneg %p603
      $region42: #{tpu_custom_call.1} parent=5 // pred_check_branch
        %606 = sbr.rel (%p604) target = $region44
      $region43: #{tpu_custom_call.1} parent=5 // pred_region
        %s607 = ssub.s32 %s15, 2
        // Predicated region
        $region45: #{tpu_custom_call.1} parent=43 // pred_check
          %p608 = pneg %p91
        $region46: #{tpu_custom_call.1} parent=43 // pred_check_branch
          %610 = sbr.rel (%p608) target = $region48
        $region47: #{tpu_custom_call.1} parent=43 // pred_region
          %s611 = sand.u32 %s76, 1
          %s612 = scalar_lea.sflag [#allocation4], %s611
          %s613 = sand.u32 %s76, 1
          %s614 = smul.addr %s613, 64
          %s615 = scalar_lea.vmem [#allocation7], %s614
          %616 = dma.done %s612, 1024
        $region48: #{tpu_custom_call.1} parent=43 // pred_fallthru
          _
      $region44: #{tpu_custom_call.1} parent=5 // pred_fallthru
        _
    $region6: #{tpu_custom_call.1} parent=1 // loop_footer
      %s19 = sadd.s32 1, %s15
    $region7: #{tpu_custom_call.1} parent=1 // loop_footer_branch
      %14 = sbr.rel target = $region3
    $region8: #{tpu_custom_call.1} parent=1 // loop_exit
      _
    %617 = vsyncpa [#allocation3], 1
    %s618 = scalar_lea.sflag [#allocation3], 1
    %619 = vsyncpa %s618, 1
    %620 = vsyncpa [#allocation6], 1
    %621 = vsyncpa [#allocation4], 1
    %s622 = scalar_lea.sflag [#allocation4], 1
    %623 = vsyncpa %s622, 1

</llo_original>
